<compile_context>
chip_gen: v5e
topology: v5e:2x2
jax: 0.10.0
libtpu: 0.0.40
codegen_flags: <defaults>
</compile_context>

<pallas_src>
import functools

import jax
import jax.numpy as jnp
from jax.experimental import pallas as pl
from jax.experimental.pallas import tpu as pltpu


# ---------------------------------------------------------------------------
# Fused single-pass kernel: pool + excite + scale for one batch element.
# ---------------------------------------------------------------------------
def _fused_kernel(x_ref, w1_ref, w2_ref, o_ref, *, inv_hw):
    # x_ref : (1, C, HW)   w1_ref : (C//r, C)   w2_ref : (C, C//r)
    # o_ref : (1, C, HW)
    x = x_ref[0]                                                      # (C, HW)
    # Spatial mean in f32 (lane-axis reduce).  C stays on sublanes throughout,
    # so the matvecs below and the final broadcast are layout-natural.
    y = jnp.sum(x.astype(jnp.float32), axis=1, keepdims=True) * inv_hw   # (C, 1)
    h = jnp.dot(w1_ref[...], y, preferred_element_type=jnp.float32)      # (C//r, 1)
    h = jnp.maximum(h, 0.0)
    g = jnp.dot(w2_ref[...], h, preferred_element_type=jnp.float32)      # (C, 1)
    g = jax.nn.sigmoid(g)
    o_ref[0] = x * g.astype(x.dtype)                                  # broadcast over lanes


# ---------------------------------------------------------------------------
# Fallback pass 1: streaming per-(batch, channel) spatial sums (f32).
# ---------------------------------------------------------------------------
def _pool_kernel(x_ref, s_ref, acc_ref, *, hw, hw_tile, ragged):
    # x_ref : (1, C, hw_tile)   s_ref : (1, C, 1) f32   acc_ref : (1, C, 1) f32
    t = pl.program_id(1)

    @pl.when(t == 0)
    def _():
        acc_ref[...] = jnp.zeros_like(acc_ref)

    x = x_ref[...].astype(jnp.float32)
    if ragged:
        # Mask lanes past the true HW extent on the (partial) last tile; OOB block
        # reads are undefined, so the tail MUST be zeroed before accumulating.
        lane = t * hw_tile + jax.lax.broadcasted_iota(jnp.int32, x.shape, 2)
        x = jnp.where(lane < hw, x, 0.0)
    acc_ref[...] += jnp.sum(x, axis=2, keepdims=True)

    @pl.when(t == pl.num_programs(1) - 1)
    def _():
        s_ref[...] = acc_ref[...]


# ---------------------------------------------------------------------------
# Fallback pass 2: lane-dense elementwise scale (pure HBM-bandwidth op).
# ---------------------------------------------------------------------------
def _scale_kernel(g_ref, x_ref, o_ref):
    # g_ref : (1, C, 1) f32   x_ref / o_ref : (1, C, hw_tile) native dtype
    o_ref[...] = x_ref[...] * g_ref[...].astype(x_ref.dtype)
    # (OOB lanes of a partial last tile hold garbage but their writes are dropped.)


# ---------------------------------------------------------------------------
# Per-generation VMEM budgets / tile sizing.
# ---------------------------------------------------------------------------
def _vmem_limits():
    cap = 64 << 20
    try:
        info = pltpu.get_tpu_info()
        cap = int(getattr(info, "vmem_capacity_bytes", cap)) or cap
    except Exception:
        pass
    if cap >= (128 << 20):      # v5e / v6e: 128 MiB physical VMEM
        vmem_limit = 80 << 20
    else:                       # v7x: 64 MiB per TensorCore
        vmem_limit = 48 << 20
    block_budget = vmem_limit - (8 << 20)   # headroom for weights/acc/compiler scratch
    return vmem_limit, block_budget


def _choose_hw_tile(hw, c, itemsize, target_bytes):
    """HW tile (lane axis): multiple of 128, sized so one (1, C, T) block ~ target."""
    t = (target_bytes // max(1, c * itemsize)) // 128 * 128
    t = max(128, t)
    return hw if t >= hw else t


def se_block(x, w1, w2):
    """SE forward. x: (B, C, H, W). w1: (C//r, C), w2: (C, C//r) (PyTorch Linear layout)."""
    B, C, H, W = x.shape
    HW = H * W
    Cr = w1.shape[0]
    itemsize = x.dtype.itemsize

    x_r = x.reshape(B, C, HW)          # free reshape: HW on the lane axis
    w1_f = w1.astype(jnp.float32)      # (C//r, C)
    w2_f = w2.astype(jnp.float32)      # (C, C//r)

    vmem_limit, block_budget = _vmem_limits()
    slab_bytes = C * HW * itemsize

    # ---- fused single-pass path (1R + 1W) -----------------------------------
    # 4x slab for double-buffered in/out blocks + ~2x for in-kernel f32 temporaries.
    if 6 * slab_bytes + (1 << 20) <= block_budget:
        cost = pl.CostEstimate(
            flops=B * (2 * C * HW + 4 * C * Cr),
            transcendentals=B * C,
            bytes_accessed=2 * B * slab_bytes + 2 * C * Cr * 4,
        )
        out_r = pl.pallas_call(
            functools.partial(_fused_kernel, inv_hw=1.0 / float(HW)),
            out_shape=jax.ShapeDtypeStruct((B, C, HW), x.dtype),
            grid_spec=pltpu.PrefetchScalarGridSpec(
                num_scalar_prefetch=0,
                grid=(B,),
                in_specs=[
                    pl.BlockSpec((1, C, HW), lambda b: (b, 0, 0)),
                    pl.BlockSpec((Cr, C), lambda b: (0, 0)),
                    pl.BlockSpec((C, Cr), lambda b: (0, 0)),
                ],
                out_specs=pl.BlockSpec((1, C, HW), lambda b: (b, 0, 0)),
            ),
            compiler_params=pltpu.CompilerParams(
                dimension_semantics=("parallel",),
                vmem_limit_bytes=vmem_limit),
            cost_estimate=cost,
        )(x_r, w1_f, w2_f)
        return out_r.reshape(B, C, H, W)

    # ---- fallback: two streaming passes (2R + 1W) ----------------------------
    # Pass 1: larger tile (input-only stream, ~2x double-buffered footprint).
    hw_tile1 = _choose_hw_tile(HW, C, itemsize, min(block_budget // 3, 24 << 20))
    n_t1 = pl.cdiv(HW, hw_tile1)
    sums = pl.pallas_call(
        functools.partial(_pool_kernel, hw=HW, hw_tile=hw_tile1,
                          ragged=(HW % hw_tile1 != 0)),
        out_shape=jax.ShapeDtypeStruct((B, C, 1), jnp.float32),
        grid_spec=pltpu.PrefetchScalarGridSpec(
            num_scalar_prefetch=0,
            grid=(B, n_t1),
            in_specs=[pl.BlockSpec((1, C, hw_tile1), lambda b, t: (b, 0, t))],
            out_specs=pl.BlockSpec((1, C, 1), lambda b, t: (b, 0, 0)),
            scratch_shapes=[pltpu.VMEM((1, C, 1), jnp.float32)],
        ),
        compiler_params=pltpu.CompilerParams(
            dimension_semantics=("parallel", "arbitrary"),
            vmem_limit_bytes=vmem_limit),
        cost_estimate=pl.CostEstimate(
            flops=B * C * HW, transcendentals=0,
            bytes_accessed=B * slab_bytes + B * C * 4),
    )(x_r)

    # Excitation as one batched matmul pair in plain jnp (tiny, f32).
    mean = sums[:, :, 0] * (1.0 / float(HW))               # (B, C)
    h = jnp.maximum(mean @ w1_f.T, 0.0)                    # (B, C//r)
    gate = jax.nn.sigmoid(h @ w2_f.T)[:, :, None]          # (B, C, 1) f32

    # Pass 2: in + out double-buffered -> smaller per-block target.
    hw_tile2 = _choose_hw_tile(HW, C, itemsize, min(block_budget // 5, 12 << 20))
    n_t2 = pl.cdiv(HW, hw_tile2)
    out_r = pl.pallas_call(
        _scale_kernel,
        out_shape=jax.ShapeDtypeStruct((B, C, HW), x.dtype),
        grid_spec=pltpu.PrefetchScalarGridSpec(
            num_scalar_prefetch=0,
            grid=(B, n_t2),
            in_specs=[
                pl.BlockSpec((1, C, 1), lambda b, t: (b, 0, 0)),
                pl.BlockSpec((1, C, hw_tile2), lambda b, t: (b, 0, t)),
            ],
            out_specs=pl.BlockSpec((1, C, hw_tile2), lambda b, t: (b, 0, t)),
        ),
        compiler_params=pltpu.CompilerParams(
            dimension_semantics=("parallel", "parallel"),
            vmem_limit_bytes=vmem_limit),
        cost_estimate=pl.CostEstimate(
            flops=B * C * HW, transcendentals=0,
            bytes_accessed=2 * B * slab_bytes + B * C * 4),
    )(gate, x_r)
    return out_r.reshape(B, C, H, W)


def se_block_ref(x, w1, w2):
    """Pure-JAX reference mirroring the PyTorch forward."""
    y = jnp.mean(x, axis=(2, 3))                # (B, C)
    y = jnp.maximum(y @ w1.T, 0.0)              # (B, C//r)
    y = jax.nn.sigmoid(y @ w2.T)                # (B, C)
    return x * y[:, :, None, None]


if __name__ == "__main__":
    key = jax.random.PRNGKey(0)
    B, C, H, W, r = 2, 8, 16, 16, 4

    k1, k2, k3 = jax.random.split(key, 3)
    x = jax.random.normal(k1, (B, C, H, W), dtype=jnp.float32)
    # PyTorch nn.Linear layout (out_features, in_features); both bias=False.
    w1 = jax.random.normal(k2, (C // r, C), dtype=jnp.float32) * 0.1
    w2 = jax.random.normal(k3, (C, C // r), dtype=jnp.float32) * 0.1

    out = se_block(x, w1, w2)
    out = jax.block_until_ready(out)

    ref = se_block_ref(x, w1, w2)
    assert out.shape == (B, C, H, W)
    assert jnp.allclose(out, ref, atol=1e-5, rtol=1e-5)
    print("KERNEL_OK")
</pallas_src>

<mosaic_0001>
module attributes {stable_mosaic.version = 11 : i64} {
  func.func @_fused_kernel(%arg0: i32, %arg1: memref<1x8x256xf32, #tpu.memory_space<vmem>>, %arg2: memref<2x8xf32, #tpu.memory_space<vmem>>, %arg3: memref<8x2xf32, #tpu.memory_space<vmem>>, %arg4: memref<1x8x256xf32, #tpu.memory_space<vmem>>) attributes {dimension_semantics = [#tpu.dimension_semantics<parallel>], iteration_bounds = array<i64: 2>, scalar_prefetch = 0 : i64, scratch_operands = 0 : i64, tpu.core_type = #tpu.core_type<tc>, window_params = [{transform_indices = @transform_0, window_bounds = array<i64: 1, 8, 256>}, {pipeline_mode = #tpu.pipeline_mode<synchronous>, transform_indices = @transform_1, window_bounds = array<i64: 2, 8>}, {pipeline_mode = #tpu.pipeline_mode<synchronous>, transform_indices = @transform_2, window_bounds = array<i64: 8, 2>}, {transform_indices = @transform_3, window_bounds = array<i64: 1, 8, 256>}]} {
    %c0 = arith.constant 0 : index
    %c0_0 = arith.constant 0 : index
    %c0_1 = arith.constant 0 : index
    %0 = vector.load %arg1[%c0, %c0_0, %c0_1] : memref<1x8x256xf32, #tpu.memory_space<vmem>>, vector<1x8x256xf32>
    %1 = vector.shape_cast %0 : vector<1x8x256xf32> to vector<8x256xf32>
    %cst = arith.constant dense<0.000000e+00> : vector<8xf32>
    %2 = vector.multi_reduction <add>, %1, %cst [1] : vector<8x256xf32> to vector<8xf32>
    %3 = vector.shape_cast %2 : vector<8xf32> to vector<8x1xf32>
    %cst_2 = arith.constant 3.906250e-03 : f32
    %4 = vector.broadcast %cst_2 : f32 to vector<8x1xf32>
    %5 = arith.mulf %3, %4 : vector<8x1xf32>
    %c0_3 = arith.constant 0 : index
    %c0_4 = arith.constant 0 : index
    %6 = vector.load %arg2[%c0_3, %c0_4] : memref<2x8xf32, #tpu.memory_space<vmem>>, vector<2x8xf32>
    %cst_5 = arith.constant dense<0.000000e+00> : vector<2x1xf32>
    %7 = tpu.matmul %6, %5, %cst_5 {dimension_numbers = #tpu.dot_dimension_numbers<[1], [0], [0], [1], [0, 0, 1, 1], [], []>} : vector<2x8xf32>, vector<8x1xf32>, vector<2x1xf32> -> vector<2x1xf32>
    %cst_6 = arith.constant 0.000000e+00 : f32
    %8 = vector.broadcast %cst_6 : f32 to vector<2x1xf32>
    %9 = arith.maximumf %7, %8 : vector<2x1xf32>
    %c0_7 = arith.constant 0 : index
    %c0_8 = arith.constant 0 : index
    %10 = vector.load %arg3[%c0_7, %c0_8] : memref<8x2xf32, #tpu.memory_space<vmem>>, vector<8x2xf32>
    %cst_9 = arith.constant dense<0.000000e+00> : vector<8x1xf32>
    %11 = tpu.matmul %10, %9, %cst_9 {dimension_numbers = #tpu.dot_dimension_numbers<[1], [0], [0], [1], [0, 0, 1, 1], [], []>} : vector<8x2xf32>, vector<2x1xf32>, vector<8x1xf32> -> vector<8x1xf32>
    %12 = arith.negf %11 : vector<8x1xf32>
    %13 = math.exp %12 : vector<8x1xf32>
    %cst_10 = arith.constant 1.000000e+00 : f32
    %14 = vector.broadcast %cst_10 : f32 to vector<8x1xf32>
    %15 = arith.addf %14, %13 : vector<8x1xf32>
    %16 = arith.divf %14, %15 : vector<8x1xf32>
    %17 = vector.broadcast %16 : vector<8x1xf32> to vector<8x256xf32>
    %18 = arith.mulf %1, %17 : vector<8x256xf32>
    %c0_11 = arith.constant 0 : index
    %c0_12 = arith.constant 0 : index
    %c0_13 = arith.constant 0 : index
    %19 = vector.load %arg4[%c0_11, %c0_12, %c0_13] : memref<1x8x256xf32, #tpu.memory_space<vmem>>, vector<1x8x256xf32>
    %20 = vector.shape_cast %19 : vector<1x8x256xf32> to vector<8x256xf32>
    %21 = vector.shape_cast %18 : vector<8x256xf32> to vector<1x8x256xf32>
    tpu.vector_store %arg4[%c0_11, %c0_12, %c0_13], %21 {strides = array<i32>} : memref<1x8x256xf32, #tpu.memory_space<vmem>>, vector<1x8x256xf32>,
    return
  }
  func.func @transform_0(%arg0: i32) -> (i32, i32, i32) {
    %c0_i32 = arith.constant 0 : i32
    %c0_i32_0 = arith.constant 0 : i32
    %c0_i32_1 = arith.constant 0 : i32
    return %arg0, %c0_i32, %c0_i32_0 : i32, i32, i32
  }
  func.func @transform_1(%arg0: i32) -> (i32, i32) {
    %c0_i32 = arith.constant 0 : i32
    %c0_i32_0 = arith.constant 0 : i32
    %c0_i32_1 = arith.constant 0 : i32
    return %c0_i32, %c0_i32_0 : i32, i32
  }
  func.func @transform_2(%arg0: i32) -> (i32, i32) {
    %c0_i32 = arith.constant 0 : i32
    %c0_i32_0 = arith.constant 0 : i32
    %c0_i32_1 = arith.constant 0 : i32
    return %c0_i32, %c0_i32_0 : i32, i32
  }
  func.func @transform_3(%arg0: i32) -> (i32, i32, i32) {
    %c0_i32 = arith.constant 0 : i32
    %c0_i32_0 = arith.constant 0 : i32
    %c0_i32_1 = arith.constant 0 : i32
    return %arg0, %c0_i32, %c0_i32_0 : i32, i32, i32
  }
}

</mosaic_0001>

<llo_original>
// kernel: tpu_custom_call.1
$region0: #{tpu_custom_call.1}
  #allocation0 [shape = 'u32[]', space=smem, size = 0x4, offset = 0x4, fixed_abs, tag = 'smem constant byte address 0x4 - core index']
  #allocation1 [shape = 'u32[72,128]{1,0:T(1,128)}', space=vmem, size = 0x9000, scoped, tag = 'internal scratch']
  %s0 = inlined_call_operand.hbm [shape: f32[2,8,256], index: 0, kind: input, shape index: {}]
  %s1 = inlined_call_operand.vmem [shape: f32[2,8], index: 1, kind: input, shape index: {}]
  %s2 = inlined_call_operand.vmem [shape: f32[8,2], index: 2, kind: input, shape index: {}]
  %s3 = inlined_call_operand.hbm [shape: f32[2,8,256], index: 3, kind: output, shape index: {}]
  %s4 = sld [smem:[#allocation0]]
  $region49: #{tpu_custom_call.1} parent=0
    _
  %s6 = ssub.s32 1, %s4
  %s7 = scalar_select 0, %s6, %s4
  $region1: #{tpu_custom_call.1} parent=0
    #allocation2 [shape = 'u8[16384]{0}', space=vmem, size = 0x4000, scoped, tag = 'input window, operand 0']
    #allocation3 [shape = 's32[2]{0}', space=sflag, size = 0x8, scoped, tag = 'scoped memory for tpu_custom_call.1']
    #allocation4 [shape = 's32[2]{0}', space=sflag, size = 0x8, scoped, tag = 'scoped memory for tpu_custom_call.1']
    #allocation5 [shape = 'u8[16384]{0}', space=vmem, size = 0x4000, scoped, tag = 'output window, operand 0']
    %8 = vsyncpa [#allocation3], 0
    %s9 = scalar_lea.sflag [#allocation3], 1
    %10 = vsyncpa %s9, 0
    %11 = vsyncpa [#allocation4], 0
    %s12 = scalar_lea.sflag [#allocation4], 1
    %13 = vsyncpa %s12, 0
    loop: start=0, step=1, limit=4
    $region2: #{tpu_custom_call.1} parent=1 // loop_pre_header
      _
    $region3: #{tpu_custom_call.1} parent=1 // loop_header
      %s15 = sphi 0, %s19
      %p16 = scmp.ge.s32.totalorder %s15, 4
      %s25 = sphi 0, %s27
      %s28 = sphi 0, %s25
      %s29 = sphi 0, %s28
      %s45 = sphi 0, %s29
      %s49 = sphi 0, %s49
      %s51 = sphi 0, %s49
      %s52 = sphi 0, %s51
      %s66 = sphi 0, %s52
      %s70 = sphi 0, %s70
      %s72 = sphi 0, %s70
      %s73 = sphi 0, %s72
      %s87 = sphi 0, %s73
      %s93 = sphi 0, %s95
      %s96 = sphi 0, %s93
      %s97 = sphi 0, %s96
      %s113 = sphi 0, %s97
    $region4: #{tpu_custom_call.1} parent=1 // loop_header_branch
      %18 = sbr.rel (%p16) target = $region8
    $region5: #{tpu_custom_call.1} parent=1 // loop_body
      %s20 = ssub.s32 %s15, 1
      %s21 = ssub.s32 %s15, 2
      %s22 = sadd.s32 %s15, 1
      %s23 = ssub.s32 %s15, %s22
      %p24 = scmp.eq.s32.totalorder %s23, 0
      %s26 = sadd.s32 %s25, 1
      %s27 = scalar_select %p24, %s25, %s26
      %p30 = pneg %p24
      %p31 = scmp.eq.s32.totalorder %s15, 1
      %p32 = por %p30, %p31
      %p33 = scmp.ne.s32.totalorder %s25, %s28
      %p34 = scmp.eq.s32.totalorder %s15, 0
      %p35 = por %p33, %p34
      %p36 = scmp.ne.s32.totalorder %s25, %s28
      %p37 = scmp.eq.s32.totalorder %s20, 1
      %p38 = por %p36, %p37
      %p39 = scmp.ne.s32.totalorder %s28, %s29
      %p40 = scmp.eq.s32.totalorder %s20, 0
      %p41 = por %p39, %p40
      %p42 = scmp.ne.s32.totalorder %s28, %s29
      %p43 = scmp.eq.s32.totalorder %s21, 1
      %p44 = por %p42, %p43
      %p46 = scmp.ne.s32.totalorder %s29, %s45
      %p47 = scmp.eq.s32.totalorder %s21, 0
      %p48 = por %p46, %p47
      %s50 = sadd.s32 %s49, 1
      %p53 = scmp.eq.s32.totalorder %s15, 1
      %p54 = scmp.ne.s32.totalorder %s49, %s51
      %p55 = scmp.eq.s32.totalorder %s15, 0
      %p56 = por %p54, %p55
      %p57 = scmp.ne.s32.totalorder %s49, %s51
      %p58 = scmp.eq.s32.totalorder %s20, 1
      %p59 = por %p57, %p58
      %p60 = scmp.ne.s32.totalorder %s51, %s52
      %p61 = scmp.eq.s32.totalorder %s20, 0
      %p62 = por %p60, %p61
      %p63 = scmp.ne.s32.totalorder %s51, %s52
      %p64 = scmp.eq.s32.totalorder %s21, 1
      %p65 = por %p63, %p64
      %p67 = scmp.ne.s32.totalorder %s52, %s66
      %p68 = scmp.eq.s32.totalorder %s21, 0
      %p69 = por %p67, %p68
      %s71 = sadd.s32 %s70, 1
      %p74 = scmp.eq.s32.totalorder %s15, 1
      %p75 = scmp.ne.s32.totalorder %s70, %s72
      %p76 = scmp.eq.s32.totalorder %s15, 0
      %p77 = por %p75, %p76
      %p78 = scmp.ne.s32.totalorder %s70, %s72
      %p79 = scmp.eq.s32.totalorder %s20, 1
      %p80 = por %p78, %p79
      %p81 = scmp.ne.s32.totalorder %s72, %s73
      %p82 = scmp.eq.s32.totalorder %s20, 0
      %p83 = por %p81, %p82
      %p84 = scmp.ne.s32.totalorder %s72, %s73
      %p85 = scmp.eq.s32.totalorder %s21, 1
      %p86 = por %p84, %p85
      %p88 = scmp.ne.s32.totalorder %s73, %s87
      %p89 = scmp.eq.s32.totalorder %s21, 0
      %p90 = por %p88, %p89
      %s91 = ssub.s32 %s15, %s22
      %p92 = scmp.eq.s32.totalorder %s91, 0
      %s94 = sadd.s32 %s93, 1
      %s95 = scalar_select %p92, %s93, %s94
      %p98 = pneg %p92
      %p99 = scmp.eq.s32.totalorder %s15, 1
      %p100 = por %p98, %p99
      %p101 = scmp.ne.s32.totalorder %s93, %s96
      %p102 = scmp.eq.s32.totalorder %s15, 0
      %p103 = por %p101, %p102
      %p104 = scmp.ne.s32.totalorder %s93, %s96
      %p105 = scmp.eq.s32.totalorder %s20, 1
      %p106 = por %p104, %p105
      %p107 = scmp.ne.s32.totalorder %s96, %s97
      %p108 = scmp.eq.s32.totalorder %s20, 0
      %p109 = por %p107, %p108
      %p110 = scmp.ne.s32.totalorder %s96, %s97
      %p111 = scmp.eq.s32.totalorder %s21, 1
      %p112 = por %p110, %p111
      %p114 = scmp.ne.s32.totalorder %s97, %s113
      %p115 = scmp.eq.s32.totalorder %s21, 0
      %p116 = por %p114, %p115
      %p117 = scmp.le.s32.totalorder 1, %s15
      %p118 = scmp.lt.s32.totalorder %s15, 3
      %p119 = pnand %p117, %p118
      %p120 = pneg %p119
      // Predicated region
      $region9: #{tpu_custom_call.1} parent=5 // pred_check
        _
      $region10: #{tpu_custom_call.1} parent=5 // pred_check_branch
        %122 = sbr.rel (%p119) target = $region12
      $region11: #{tpu_custom_call.1} parent=5 // pred_region
        %s123 = ssub.s32 %s15, 1
        // Predicated region
        $region13: #{tpu_custom_call.1} parent=11 // pred_check
          %p124 = pneg %p62
        $region14: #{tpu_custom_call.1} parent=11 // pred_check_branch
          %126 = sbr.rel (%p124) target = $region16
        $region15: #{tpu_custom_call.1} parent=11 // pred_region
          _
        $region16: #{tpu_custom_call.1} parent=11 // pred_fallthru
          _
        // Predicated region
        $region17: #{tpu_custom_call.1} parent=11 // pred_check
          %p127 = pneg %p83
        $region18: #{tpu_custom_call.1} parent=11 // pred_check_branch
          %129 = sbr.rel (%p127) target = $region20
        $region19: #{tpu_custom_call.1} parent=11 // pred_region
          _
        $region20: #{tpu_custom_call.1} parent=11 // pred_fallthru
          _
      $region12: #{tpu_custom_call.1} parent=5 // pred_fallthru
        _
      %p130 = scmp.lt.s32.totalorder %s15, 2
      // Predicated region
      $region21: #{tpu_custom_call.1} parent=5 // pred_check
        %p131 = pneg %p130
      $region22: #{tpu_custom_call.1} parent=5 // pred_check_branch
        %133 = sbr.rel (%p131) target = $region24
      $region23: #{tpu_custom_call.1} parent=5 // pred_region
        // Predicated region
        $region25: #{tpu_custom_call.1} parent=23 // pred_check
          %p134 = pneg %p35
        $region26: #{tpu_custom_call.1} parent=23 // pred_check_branch
          %136 = sbr.rel (%p134) target = $region28
        $region27: #{tpu_custom_call.1} parent=23 // pred_region
          %s137 = sand.u32 %s25, 1
          %s138 = scalar_lea.sflag [#allocation3], %s137
          %s139 = sand.u32 %s25, 1
          %s140 = smul.addr %s139, 16
          %s141 = scalar_lea.vmem [#allocation2], %s140
          %143 = vsyncadd %s138, 0
          %s144 = smul.addr %s15, 2
          %s145 = smul.addr %s144, 8
          %s146 = scalar_lea.hbm %s0, %s145
          %s148 = sshll.u32 %s146, 4
          %s149 = int_to_ptr.hbm [resolvable:$true] %s148
          %s150 = sshll.u32 %s141, 4
          %s151 = int_to_ptr.vmem [resolvable:$true] %s150
          %153 = dma.hbm_to_vmem [thread:$0]  %s149, 256, %s151, %s138
        $region28: #{tpu_custom_call.1} parent=23 // pred_fallthru
          _
      $region24: #{tpu_custom_call.1} parent=5 // pred_fallthru
        _
      %p154 = scmp.le.s32.totalorder 1, %s15
      %p155 = scmp.lt.s32.totalorder %s15, 3
      %p156 = pnand %p154, %p155
      %p157 = pneg %p156
      // Predicated region
      $region29: #{tpu_custom_call.1} parent=5 // pred_check
        _
      $region30: #{tpu_custom_call.1} parent=5 // pred_check_branch
        %159 = sbr.rel (%p156) target = $region32
      $region31: #{tpu_custom_call.1} parent=5 // pred_region
        %s160 = ssub.s32 %s15, 1
        %s161 = sand.u32 %s28, 1
        %s162 = scalar_lea.sflag [#allocation3], %s161
        %s163 = sand.u32 %s28, 1
        %s164 = smul.addr %s163, 16
        %s165 = scalar_lea.vmem [#allocation2], %s164
        // Predicated region
        $region33: #{tpu_custom_call.1} parent=31 // pred_check
          %p166 = pneg %p41
        $region34: #{tpu_custom_call.1} parent=31 // pred_check_branch
          %168 = sbr.rel (%p166) target = $region36
        $region35: #{tpu_custom_call.1} parent=31 // pred_region
          %170 = dma.done %s162, 256
        $region36: #{tpu_custom_call.1} parent=31 // pred_fallthru
          _
        %s171 = sand.u32 %s28, 1
        %s172 = scalar_lea.sflag [#allocation3], %s171
        %s173 = sand.u32 %s28, 1
        %s174 = smul.addr %s173, 16
        %s175 = scalar_lea.vmem [#allocation2], %s174
        %p176 = pneg %p41
        %p177 = pneg %p38
        %p178 = pneg %p62
        %p179 = pneg %p59
        %p180 = pneg %p83
        %p181 = pneg %p80
        %p182 = pneg %p109
        %p183 = pneg %p106
        %s184 = sand.u32 %s96, 1
        %s185 = scalar_lea.sflag [#allocation4], %s184
        %s186 = sand.u32 %s96, 1
        %s187 = smul.addr %s186, 16
        %s188 = scalar_lea.vmem [#allocation5], %s187
        %v189 = vld [vmem:[%s165] sm:$0xff]
        %v190 = vld [vmem:[%s165 + $0x8] sm:$0xff]
        %v191 = vadd.f32 %v189, %v190
        %192 = vadd.xlane.f32.xlu0 %v191
        %v193 = vpop.xlane.xlu0 %192
        %v194 = vmul.f32 %v193, 0.00390625
        %v195 = vld [vmem:[%s1] sm:$0x3]
        %vm196 = vcmask 64512
        %v198 = vsel %vm196, %v195, 0
        %200 = vmatpush.msra.mxu0 0.0
        %201 = vmatpush.msra.mxu0 0.0
        %202 = vmatpush.msra.mxu0 0.0
        %203 = vmatpush.msra.mxu0 0.0
        %204 = vmatpush.msra.mxu0 0.0
        %205 = vmatpush.msra.mxu0 0.0
        %206 = vmatpush.msra.mxu0 0.0
        %207 = vmatpush.msra.mxu0 0.0
        %208 = vmatpush.msra.mxu0 0.0
        %209 = vmatpush.msra.mxu0 0.0
        %210 = vmatpush.msra.mxu0 0.0
        %211 = vmatpush.msra.mxu0 0.0
        %212 = vmatpush.msra.mxu0 0.0
        %213 = vmatpush.msra.mxu0 0.0
        %214 = vmatpush.msra.mxu0 0.0
        %215 = vmatpush.msra.mxu0 %v194
        %216 = vmatmul.f32.gmra.mxu0 %v198
        %v217 = vpop.f32.mrf.mxu0
        %v218 = vadd.f32 0.0, %v217
        %219 = vdwg.mxu0
        %v220 = vmax.f32 %v218, 0.0
        %v221 = vld [vmem:[%s2] sm:$0xff]
        %vm222 = vcmask 15360
        %v224 = vsel %vm222, %v221, 0
        %vm226 = vcmask 1041408
        %v228 = vsel %vm226, %v220, 0
        %230 = vmatpush.msra.mxu0 0.0
        %231 = vmatpush.msra.mxu0 0.0
        %232 = vmatpush.msra.mxu0 0.0
        %233 = vmatpush.msra.mxu0 0.0
        %234 = vmatpush.msra.mxu0 0.0
        %235 = vmatpush.msra.mxu0 0.0
        %236 = vmatpush.msra.mxu0 0.0
        %237 = vmatpush.msra.mxu0 0.0
        %238 = vmatpush.msra.mxu0 0.0
        %239 = vmatpush.msra.mxu0 0.0
        %240 = vmatpush.msra.mxu0 0.0
        %241 = vmatpush.msra.mxu0 0.0
        %242 = vmatpush.msra.mxu0 0.0
        %243 = vmatpush.msra.mxu0 0.0
        %244 = vmatpush.msra.mxu0 0.0
        %245 = vmatpush.msra.mxu0 %v228
        %246 = vmatmul.f32.gmra.mxu0 %v224
        %v247 = vpop.f32.mrf.mxu0
        %v248 = vadd.f32 0.0, %v247
        %249 = vdwg.mxu0
        %v250 = vxor.u32 %v248, 2147483648
        %v251 = vmul.f32 %v250, 1.442695
        %v252 = vpow.pop %v251
        %v253 = vadd.f32 %v252, 1.0
        %v254 = vrcp.pop %v253
        %v255 = vmul.f32 %v253, %v254
        %v256 = vsub.f32 1.0, %v255
        %v257 = vmul.f32 %v254, %v256
        %v258 = vadd.f32 %v254, %v257
        %vm259 = vweird.f32 %v253
        %vm260 = vweird.f32 %v254
        %vm261 = vmor %vm259, %vm260
        %v262 = vsel %vm261, %v254, %v258
        %v263 = vand.u32 2147483647, %v253
        %vm264 = vcmp.eq.f32.partialorder %v263, 8.507059e+37
        %v265 = vand.u32 %v253, 2147483648
        %v266 = vor.u32 1.1754944e-38, %v265
        %v267 = vsel %vm264, %v266, %v262
        %v268 = vmul.f32 1.0, %v267
        %270 = vset.pattern.permute.xlu0 0
        %271 = vperm.xlu0 %270, %v268
        %v272 = vpop.permute.xlu0 %271
        %v274 = vmul.f32 %v189, %v272
        %v275 = vmul.f32 %v190, %v272
        %276 = vst [vmem:[%s188] sm:$0xff] %v274
        %277 = vst [vmem:[%s188 + $0x8] sm:$0xff] %v275
        %s278 = sand.u32 %s96, 1
        %s279 = scalar_lea.sflag [#allocation4], %s278
        %s280 = sand.u32 %s96, 1
        %s281 = smul.addr %s280, 16
        %s282 = scalar_lea.vmem [#allocation5], %s281
        // Predicated region
        $region37: #{tpu_custom_call.1} parent=31 // pred_check
          %p283 = pneg %p106
        $region38: #{tpu_custom_call.1} parent=31 // pred_check_branch
          %285 = sbr.rel (%p283) target = $region40
        $region39: #{tpu_custom_call.1} parent=31 // pred_region
          %287 = vsyncadd %s279, 0
          %s288 = smul.addr %s20, 2
          %s289 = smul.addr %s288, 8
          %s290 = scalar_lea.hbm %s3, %s289
          %s292 = sshll.u32 %s282, 4
          %s293 = int_to_ptr.vmem [resolvable:$true] %s292
          %s294 = sshll.u32 %s290, 4
          %s295 = int_to_ptr.hbm [resolvable:$true] %s294
          %297 = dma.vmem_to_hbm [thread:$0]  %s293, 256, %s295, %s279
        $region40: #{tpu_custom_call.1} parent=31 // pred_fallthru
          _
      $region32: #{tpu_custom_call.1} parent=5 // pred_fallthru
        _
      %p298 = scmp.le.s32.totalorder 2, %s15
      // Predicated region
      $region41: #{tpu_custom_call.1} parent=5 // pred_check
        %p299 = pneg %p298
      $region42: #{tpu_custom_call.1} parent=5 // pred_check_branch
        %301 = sbr.rel (%p299) target = $region44
      $region43: #{tpu_custom_call.1} parent=5 // pred_region
        %s302 = ssub.s32 %s15, 2
        // Predicated region
        $region45: #{tpu_custom_call.1} parent=43 // pred_check
          %p303 = pneg %p112
        $region46: #{tpu_custom_call.1} parent=43 // pred_check_branch
          %305 = sbr.rel (%p303) target = $region48
        $region47: #{tpu_custom_call.1} parent=43 // pred_region
          %s306 = sand.u32 %s97, 1
          %s307 = scalar_lea.sflag [#allocation4], %s306
          %s308 = sand.u32 %s97, 1
          %s309 = smul.addr %s308, 16
          %s310 = scalar_lea.vmem [#allocation5], %s309
          %312 = dma.done %s307, 256
        $region48: #{tpu_custom_call.1} parent=43 // pred_fallthru
          _
      $region44: #{tpu_custom_call.1} parent=5 // pred_fallthru
        _
    $region6: #{tpu_custom_call.1} parent=1 // loop_footer
      %s19 = sadd.s32 1, %s15
    $region7: #{tpu_custom_call.1} parent=1 // loop_footer_branch
      %14 = sbr.rel target = $region3
    $region8: #{tpu_custom_call.1} parent=1 // loop_exit
      _
    %313 = vsyncpa [#allocation3], 1
    %s314 = scalar_lea.sflag [#allocation3], 1
    %315 = vsyncpa %s314, 1
    %316 = vsyncpa [#allocation4], 1
    %s317 = scalar_lea.sflag [#allocation4], 1
    %318 = vsyncpa %s317, 1

</llo_original>
